<compile_context>
chip_gen: v6e
topology: v6e:2x2x1
jax: 0.10.0
libtpu: 0.0.40
codegen_flags: <defaults>
</compile_context>

<pallas_src>
import functools

import jax
import jax.numpy as jnp
from jax.experimental import pallas as pl
from jax.experimental.pallas import tpu as pltpu


# ---------------------------------------------------------------------------
# Fused single-pass kernel: one grid step per image, whole (C, HW) block.
# ---------------------------------------------------------------------------
def _fused_kernel(x_ref, w_ref, b_ref, o_ref, *, inv_hw):
    # x_ref: (C, HW)   w_ref: (C, C)   b_ref: (C, 1)   o_ref: (C, HW)
    x = x_ref[...]
    sums = jnp.sum(x.astype(jnp.float32), axis=1, keepdims=True)      # (C, 1)
    mean = sums * inv_hw
    z = jnp.dot(w_ref[...], mean,
                preferred_element_type=jnp.float32) + b_ref[...]      # (C, 1)
    gate = jax.nn.sigmoid(z)
    o_ref[...] = (x.astype(jnp.float32) * gate).astype(o_ref.dtype)


# ---------------------------------------------------------------------------
# Streaming pass 1: per-(image, spatial-tile) partial channel sums.
# ---------------------------------------------------------------------------
def _pool_partial_kernel(x_ref, o_ref, *, spatial_len, tile, ragged):
    # x_ref: (C, T) spatial tile (batch/tile dims squeezed); o_ref: (C, 1).
    xf = x_ref[...].astype(jnp.float32)
    if ragged:
        # Last spatial block may be partial: zero the out-of-bounds lane tail
        # (garbage reads) before reducing.
        t = pl.program_id(1)
        pos = t * tile + jax.lax.broadcasted_iota(jnp.int32, xf.shape, 1)
        xf = jnp.where(pos < spatial_len, xf, 0.0)
    o_ref[...] = jnp.sum(xf, axis=1, keepdims=True)


# ---------------------------------------------------------------------------
# Streaming pass 2: broadcast-scale x by the per-(n, c) gate.
# Partial last output blocks are masked on writeback by Pallas -> no mask.
# ---------------------------------------------------------------------------
def _scale_kernel(x_ref, gate_ref, o_ref):
    o_ref[...] = (x_ref[...].astype(jnp.float32)
                  * gate_ref[...]).astype(o_ref.dtype)


def channel_attention(x, w, b, *, target_block_bytes=4 << 20,
                      vmem_limit_bytes=32 << 20, force_two_pass=False):
    """ChannelAttention forward.

    x: (N, C, H, W) input.
    w: (C, C) fc 1x1-conv weight (out_ch, in_ch).
    b: (C,)   fc bias.
    """
    N, C, H, W = x.shape
    HW = H * W
    elem = jnp.dtype(x.dtype).itemsize

    # Spatial-last layout: free reshape, keeps NCHW semantics, lane-dense.
    x3 = x.reshape(N, C, HW)
    w2 = w.astype(jnp.float32)
    b2 = b.reshape(C, 1).astype(jnp.float32)

    # ------------------------------------------------------------------
    # Fused single-pass path: whole image (in + out, double-buffered, plus
    # a possible f32 upcast temp and the fc weight) must fit the VMEM limit
    # with headroom.  Cuts HBM traffic from 3x to 2x of the tensor bytes.
    # ------------------------------------------------------------------
    image_bytes = C * HW * elem
    fused_footprint = (4 * image_bytes          # double-buffered in + out
                       + C * HW * 4             # f32 compute temp
                       + 2 * C * C * 4          # fc weight (double-buffered)
                       + (1 << 16))             # bias + slack
    if not force_two_pass and fused_footprint <= vmem_limit_bytes - (4 << 20):
        img_spec = pl.BlockSpec((None, C, HW), lambda n: (n, 0, 0))
        out3 = pl.pallas_call(
            functools.partial(_fused_kernel, inv_hw=1.0 / HW),
            out_shape=jax.ShapeDtypeStruct((N, C, HW), x.dtype),
            grid_spec=pltpu.PrefetchScalarGridSpec(
                num_scalar_prefetch=0,
                grid=(N,),
                in_specs=[img_spec,
                          pl.BlockSpec((C, C), lambda n: (0, 0)),
                          pl.BlockSpec((C, 1), lambda n: (0, 0))],
                out_specs=img_spec),
            compiler_params=pltpu.CompilerParams(
                dimension_semantics=("parallel",),
                vmem_limit_bytes=vmem_limit_bytes),
        )(x3, w2, b2)
        return out3.reshape(N, C, H, W)

    # ------------------------------------------------------------------
    # Two-pass streaming path: no jnp.pad, no output slice.
    # ------------------------------------------------------------------
    # Spatial tile: ~target_block_bytes per x block, multiple of 128 lanes
    # (or the full spatial extent, which is always a legal block dim).
    t_cap = max(128, (target_block_bytes // max(C * elem, 1)) // 128 * 128)
    if HW <= t_cap:
        T = HW                      # single full-extent spatial block
    else:
        T = t_cap                   # 128-multiple; last block may be partial
    n_t = pl.cdiv(HW, T)
    ragged = (HW % T) != 0

    x_spec = pl.BlockSpec((None, C, T), lambda n, t: (n, 0, t))

    # Pass 1: fully-parallel partial channel sums, one (C, 1) block per step.
    partials = pl.pallas_call(
        functools.partial(_pool_partial_kernel, spatial_len=HW, tile=T,
                          ragged=ragged),
        out_shape=jax.ShapeDtypeStruct((N, n_t, C, 1), jnp.float32),
        grid_spec=pltpu.PrefetchScalarGridSpec(
            num_scalar_prefetch=0,
            grid=(N, n_t),
            in_specs=[x_spec],
            out_specs=pl.BlockSpec((None, None, C, 1),
                                   lambda n, t: (n, t, 0, 0))),
        compiler_params=pltpu.CompilerParams(
            dimension_semantics=("parallel", "parallel"),
            vmem_limit_bytes=vmem_limit_bytes),
    )(x3)

    # Hoisted: combine partial sums, 1x1 fc, sigmoid.  Tiny ops, plain XLA,
    # keeps the fc weight out of the streaming kernels' VMEM budget.
    means = jnp.sum(partials[..., 0], axis=1) * (1.0 / HW)      # (N, C)
    z = means @ w2.T + b2.reshape(1, C)                         # (N, C)
    gates = jax.nn.sigmoid(z).reshape(N, C, 1)                  # (N, C, 1) f32

    # Pass 2: broadcast-scale x by the per-(n, c) gate.
    out3 = pl.pallas_call(
        _scale_kernel,
        out_shape=jax.ShapeDtypeStruct((N, C, HW), x.dtype),
        grid_spec=pltpu.PrefetchScalarGridSpec(
            num_scalar_prefetch=0,
            grid=(N, n_t),
            in_specs=[x_spec,
                      pl.BlockSpec((None, C, 1), lambda n, t: (n, 0, 0))],
            out_specs=x_spec),
        compiler_params=pltpu.CompilerParams(
            dimension_semantics=("parallel", "parallel"),
            vmem_limit_bytes=vmem_limit_bytes),
    )(x3, gates)

    return out3.reshape(N, C, H, W)


def reference(x, w, b):
    """Pure-JAX mirror of the PyTorch forward (for validation)."""
    pooled = jnp.mean(x, axis=(2, 3), keepdims=True)              # (N, C, 1, 1)
    z = jnp.einsum('ncij,oc->noij', pooled, w) + b.reshape(1, -1, 1, 1)
    return x * jax.nn.sigmoid(z)


if __name__ == "__main__":
    key = jax.random.PRNGKey(0)

    def run_case(N, C, H, W, k, **kw):
        ks = jax.random.split(k, 3)
        x = jax.random.normal(ks[0], (N, C, H, W), jnp.float32)
        w = jax.random.normal(ks[1], (C, C), jnp.float32) / jnp.sqrt(C)
        b = jax.random.normal(ks[2], (C,), jnp.float32) * 0.1
        out = jax.block_until_ready(channel_attention(x, w, b, **kw))
        ref = reference(x, w, b)
        assert out.shape == x.shape
        err = float(jnp.max(jnp.abs(out - ref)))
        assert jnp.allclose(out, ref, atol=1e-4, rtol=1e-4), err

    # Fused single-pass path: aligned spatial extent and a ragged one.
    run_case(2, 16, 16, 16, jax.random.fold_in(key, 0))
    run_case(1, 16, 5, 7, jax.random.fold_in(key, 1))
    # Two-pass streaming path with a partial (ragged) last spatial block:
    # tiny target_block_bytes forces T=128 tiles over HW=144.
    run_case(2, 32, 12, 12, jax.random.fold_in(key, 2),
             force_two_pass=True, target_block_bytes=1 << 12)
    # Two-pass path where the whole spatial extent fits one full-dim block.
    run_case(2, 16, 16, 16, jax.random.fold_in(key, 3), force_two_pass=True)
    print("KERNEL_OK")
</pallas_src>

<mosaic_0001>
module attributes {stable_mosaic.version = 11 : i64} {
  func.func @_fused_kernel(%arg0: i32, %arg1: memref<1x16x256xf32, #tpu.memory_space<vmem>>, %arg2: memref<16x16xf32, #tpu.memory_space<vmem>>, %arg3: memref<16x1xf32, #tpu.memory_space<vmem>>, %arg4: memref<1x16x256xf32, #tpu.memory_space<vmem>>) attributes {dimension_semantics = [#tpu.dimension_semantics<parallel>], iteration_bounds = array<i64: 2>, scalar_prefetch = 0 : i64, scratch_operands = 0 : i64, tpu.core_type = #tpu.core_type<tc>, window_params = [{transform_indices = @transform_0, window_bounds = array<i64: 1, 16, 256>}, {pipeline_mode = #tpu.pipeline_mode<synchronous>, transform_indices = @transform_1, window_bounds = array<i64: 16, 16>}, {pipeline_mode = #tpu.pipeline_mode<synchronous>, transform_indices = @transform_2, window_bounds = array<i64: 16, 1>}, {transform_indices = @transform_3, window_bounds = array<i64: 1, 16, 256>}]} {
    %c0 = arith.constant 0 : index
    %c0_0 = arith.constant 0 : index
    %c0_1 = arith.constant 0 : index
    %0 = vector.load %arg1[%c0, %c0_0, %c0_1] : memref<1x16x256xf32, #tpu.memory_space<vmem>>, vector<1x16x256xf32>
    %1 = vector.shape_cast %0 : vector<1x16x256xf32> to vector<16x256xf32>
    %cst = arith.constant dense<0.000000e+00> : vector<16xf32>
    %2 = vector.multi_reduction <add>, %1, %cst [1] : vector<16x256xf32> to vector<16xf32>
    %3 = vector.shape_cast %2 : vector<16xf32> to vector<16x1xf32>
    %cst_2 = arith.constant 3.906250e-03 : f32
    %4 = vector.broadcast %cst_2 : f32 to vector<16x1xf32>
    %5 = arith.mulf %3, %4 : vector<16x1xf32>
    %c0_3 = arith.constant 0 : index
    %c0_4 = arith.constant 0 : index
    %6 = vector.load %arg2[%c0_3, %c0_4] : memref<16x16xf32, #tpu.memory_space<vmem>>, vector<16x16xf32>
    %cst_5 = arith.constant dense<0.000000e+00> : vector<16x1xf32>
    %7 = tpu.matmul %6, %5, %cst_5 {dimension_numbers = #tpu.dot_dimension_numbers<[1], [0], [0], [1], [0, 0, 1, 1], [], []>} : vector<16x16xf32>, vector<16x1xf32>, vector<16x1xf32> -> vector<16x1xf32>
    %c0_6 = arith.constant 0 : index
    %c0_7 = arith.constant 0 : index
    %8 = vector.load %arg3[%c0_6, %c0_7] : memref<16x1xf32, #tpu.memory_space<vmem>>, vector<16x1xf32>
    %9 = arith.addf %7, %8 : vector<16x1xf32>
    %10 = arith.negf %9 : vector<16x1xf32>
    %11 = math.exp %10 : vector<16x1xf32>
    %cst_8 = arith.constant 1.000000e+00 : f32
    %12 = vector.broadcast %cst_8 : f32 to vector<16x1xf32>
    %13 = arith.addf %12, %11 : vector<16x1xf32>
    %14 = arith.divf %12, %13 : vector<16x1xf32>
    %15 = vector.broadcast %14 : vector<16x1xf32> to vector<16x256xf32>
    %16 = arith.mulf %1, %15 : vector<16x256xf32>
    %c0_9 = arith.constant 0 : index
    %c0_10 = arith.constant 0 : index
    %c0_11 = arith.constant 0 : index
    %17 = vector.load %arg4[%c0_9, %c0_10, %c0_11] : memref<1x16x256xf32, #tpu.memory_space<vmem>>, vector<1x16x256xf32>
    %18 = vector.shape_cast %17 : vector<1x16x256xf32> to vector<16x256xf32>
    %19 = vector.shape_cast %16 : vector<16x256xf32> to vector<1x16x256xf32>
    tpu.vector_store %arg4[%c0_9, %c0_10, %c0_11], %19 {strides = array<i32>} : memref<1x16x256xf32, #tpu.memory_space<vmem>>, vector<1x16x256xf32>,
    return
  }
  func.func @transform_0(%arg0: i32) -> (i32, i32, i32) {
    %c0_i32 = arith.constant 0 : i32
    %c0_i32_0 = arith.constant 0 : i32
    %c0_i32_1 = arith.constant 0 : i32
    return %arg0, %c0_i32, %c0_i32_0 : i32, i32, i32
  }
  func.func @transform_1(%arg0: i32) -> (i32, i32) {
    %c0_i32 = arith.constant 0 : i32
    %c0_i32_0 = arith.constant 0 : i32
    %c0_i32_1 = arith.constant 0 : i32
    return %c0_i32, %c0_i32_0 : i32, i32
  }
  func.func @transform_2(%arg0: i32) -> (i32, i32) {
    %c0_i32 = arith.constant 0 : i32
    %c0_i32_0 = arith.constant 0 : i32
    %c0_i32_1 = arith.constant 0 : i32
    return %c0_i32, %c0_i32_0 : i32, i32
  }
  func.func @transform_3(%arg0: i32) -> (i32, i32, i32) {
    %c0_i32 = arith.constant 0 : i32
    %c0_i32_0 = arith.constant 0 : i32
    %c0_i32_1 = arith.constant 0 : i32
    return %arg0, %c0_i32, %c0_i32_0 : i32, i32, i32
  }
}

</mosaic_0001>

<llo_original>
// kernel: tpu_custom_call.1
$region0: #{tpu_custom_call.1}
  #allocation0 [shape = 'u32[]', space=smem, size = 0x4, offset = 0x4, fixed_abs, tag = 'smem constant byte address 0x4 - core index']
  #allocation1 [shape = 'u32[144,128]{1,0:T(1,128)}', space=vmem, size = 0x12000, scoped, tag = 'internal scratch']
  %s0 = inlined_call_operand.hbm [shape: f32[2,16,256], index: 0, kind: input, shape index: {}]
  %s1 = inlined_call_operand.vmem [shape: f32[16,16], index: 1, kind: input, shape index: {}]
  %s2 = inlined_call_operand.vmem [shape: f32[16,1], index: 2, kind: input, shape index: {}]
  %s3 = inlined_call_operand.hbm [shape: f32[2,16,256], index: 3, kind: output, shape index: {}]
  %s4 = sld [smem:[#allocation0]]
  $region49: #{tpu_custom_call.1} parent=0
    _
  %s6 = ssub.s32 1, %s4
  %s7 = scalar_select 0, %s6, %s4
  $region1: #{tpu_custom_call.1} parent=0
    #allocation2 [shape = 'u8[32768]{0}', space=vmem, size = 0x8000, scoped, tag = 'input window, operand 0']
    #allocation3 [shape = 's32[2]{0}', space=sflag, size = 0x8, scoped, tag = 'scoped memory for tpu_custom_call.1']
    #allocation4 [shape = 's32[2]{0}', space=sflag, size = 0x8, scoped, tag = 'scoped memory for tpu_custom_call.1']
    #allocation5 [shape = 'u8[32768]{0}', space=vmem, size = 0x8000, scoped, tag = 'output window, operand 0']
    %8 = vsyncpa [#allocation3], 0
    %s9 = scalar_lea.sflag [#allocation3], 1
    %10 = vsyncpa %s9, 0
    %11 = vsyncpa [#allocation4], 0
    %s12 = scalar_lea.sflag [#allocation4], 1
    %13 = vsyncpa %s12, 0
    loop: start=0, step=1, limit=4
    $region2: #{tpu_custom_call.1} parent=1 // loop_pre_header
      _
    $region3: #{tpu_custom_call.1} parent=1 // loop_header
      %s15 = sphi 0, %s19
      %p16 = scmp.ge.s32.totalorder %s15, 4
      %s25 = sphi 0, %s27
      %s28 = sphi 0, %s25
      %s29 = sphi 0, %s28
      %s45 = sphi 0, %s29
      %s49 = sphi 0, %s49
      %s51 = sphi 0, %s49
      %s52 = sphi 0, %s51
      %s66 = sphi 0, %s52
      %s70 = sphi 0, %s70
      %s72 = sphi 0, %s70
      %s73 = sphi 0, %s72
      %s87 = sphi 0, %s73
      %s93 = sphi 0, %s95
      %s96 = sphi 0, %s93
      %s97 = sphi 0, %s96
      %s113 = sphi 0, %s97
    $region4: #{tpu_custom_call.1} parent=1 // loop_header_branch
      %18 = sbr.rel (%p16) target = $region8
    $region5: #{tpu_custom_call.1} parent=1 // loop_body
      %s20 = ssub.s32 %s15, 1
      %s21 = ssub.s32 %s15, 2
      %s22 = sadd.s32 %s15, 1
      %s23 = ssub.s32 %s15, %s22
      %p24 = scmp.eq.s32.totalorder %s23, 0
      %s26 = sadd.s32 %s25, 1
      %s27 = scalar_select %p24, %s25, %s26
      %p30 = pneg %p24
      %p31 = scmp.eq.s32.totalorder %s15, 1
      %p32 = por %p30, %p31
      %p33 = scmp.ne.s32.totalorder %s25, %s28
      %p34 = scmp.eq.s32.totalorder %s15, 0
      %p35 = por %p33, %p34
      %p36 = scmp.ne.s32.totalorder %s25, %s28
      %p37 = scmp.eq.s32.totalorder %s20, 1
      %p38 = por %p36, %p37
      %p39 = scmp.ne.s32.totalorder %s28, %s29
      %p40 = scmp.eq.s32.totalorder %s20, 0
      %p41 = por %p39, %p40
      %p42 = scmp.ne.s32.totalorder %s28, %s29
      %p43 = scmp.eq.s32.totalorder %s21, 1
      %p44 = por %p42, %p43
      %p46 = scmp.ne.s32.totalorder %s29, %s45
      %p47 = scmp.eq.s32.totalorder %s21, 0
      %p48 = por %p46, %p47
      %s50 = sadd.s32 %s49, 1
      %p53 = scmp.eq.s32.totalorder %s15, 1
      %p54 = scmp.ne.s32.totalorder %s49, %s51
      %p55 = scmp.eq.s32.totalorder %s15, 0
      %p56 = por %p54, %p55
      %p57 = scmp.ne.s32.totalorder %s49, %s51
      %p58 = scmp.eq.s32.totalorder %s20, 1
      %p59 = por %p57, %p58
      %p60 = scmp.ne.s32.totalorder %s51, %s52
      %p61 = scmp.eq.s32.totalorder %s20, 0
      %p62 = por %p60, %p61
      %p63 = scmp.ne.s32.totalorder %s51, %s52
      %p64 = scmp.eq.s32.totalorder %s21, 1
      %p65 = por %p63, %p64
      %p67 = scmp.ne.s32.totalorder %s52, %s66
      %p68 = scmp.eq.s32.totalorder %s21, 0
      %p69 = por %p67, %p68
      %s71 = sadd.s32 %s70, 1
      %p74 = scmp.eq.s32.totalorder %s15, 1
      %p75 = scmp.ne.s32.totalorder %s70, %s72
      %p76 = scmp.eq.s32.totalorder %s15, 0
      %p77 = por %p75, %p76
      %p78 = scmp.ne.s32.totalorder %s70, %s72
      %p79 = scmp.eq.s32.totalorder %s20, 1
      %p80 = por %p78, %p79
      %p81 = scmp.ne.s32.totalorder %s72, %s73
      %p82 = scmp.eq.s32.totalorder %s20, 0
      %p83 = por %p81, %p82
      %p84 = scmp.ne.s32.totalorder %s72, %s73
      %p85 = scmp.eq.s32.totalorder %s21, 1
      %p86 = por %p84, %p85
      %p88 = scmp.ne.s32.totalorder %s73, %s87
      %p89 = scmp.eq.s32.totalorder %s21, 0
      %p90 = por %p88, %p89
      %s91 = ssub.s32 %s15, %s22
      %p92 = scmp.eq.s32.totalorder %s91, 0
      %s94 = sadd.s32 %s93, 1
      %s95 = scalar_select %p92, %s93, %s94
      %p98 = pneg %p92
      %p99 = scmp.eq.s32.totalorder %s15, 1
      %p100 = por %p98, %p99
      %p101 = scmp.ne.s32.totalorder %s93, %s96
      %p102 = scmp.eq.s32.totalorder %s15, 0
      %p103 = por %p101, %p102
      %p104 = scmp.ne.s32.totalorder %s93, %s96
      %p105 = scmp.eq.s32.totalorder %s20, 1
      %p106 = por %p104, %p105
      %p107 = scmp.ne.s32.totalorder %s96, %s97
      %p108 = scmp.eq.s32.totalorder %s20, 0
      %p109 = por %p107, %p108
      %p110 = scmp.ne.s32.totalorder %s96, %s97
      %p111 = scmp.eq.s32.totalorder %s21, 1
      %p112 = por %p110, %p111
      %p114 = scmp.ne.s32.totalorder %s97, %s113
      %p115 = scmp.eq.s32.totalorder %s21, 0
      %p116 = por %p114, %p115
      %p117 = scmp.le.s32.totalorder 1, %s15
      %p118 = scmp.lt.s32.totalorder %s15, 3
      %p119 = pnand %p117, %p118
      %p120 = pneg %p119
      // Predicated region
      $region9: #{tpu_custom_call.1} parent=5 // pred_check
        _
      $region10: #{tpu_custom_call.1} parent=5 // pred_check_branch
        %122 = sbr.rel (%p119) target = $region12
      $region11: #{tpu_custom_call.1} parent=5 // pred_region
        %s123 = ssub.s32 %s15, 1
        // Predicated region
        $region13: #{tpu_custom_call.1} parent=11 // pred_check
          %p124 = pneg %p62
        $region14: #{tpu_custom_call.1} parent=11 // pred_check_branch
          %126 = sbr.rel (%p124) target = $region16
        $region15: #{tpu_custom_call.1} parent=11 // pred_region
          _
        $region16: #{tpu_custom_call.1} parent=11 // pred_fallthru
          _
        // Predicated region
        $region17: #{tpu_custom_call.1} parent=11 // pred_check
          %p127 = pneg %p83
        $region18: #{tpu_custom_call.1} parent=11 // pred_check_branch
          %129 = sbr.rel (%p127) target = $region20
        $region19: #{tpu_custom_call.1} parent=11 // pred_region
          _
        $region20: #{tpu_custom_call.1} parent=11 // pred_fallthru
          _
      $region12: #{tpu_custom_call.1} parent=5 // pred_fallthru
        _
      %p130 = scmp.lt.s32.totalorder %s15, 2
      // Predicated region
      $region21: #{tpu_custom_call.1} parent=5 // pred_check
        %p131 = pneg %p130
      $region22: #{tpu_custom_call.1} parent=5 // pred_check_branch
        %133 = sbr.rel (%p131) target = $region24
      $region23: #{tpu_custom_call.1} parent=5 // pred_region
        // Predicated region
        $region25: #{tpu_custom_call.1} parent=23 // pred_check
          %p134 = pneg %p35
        $region26: #{tpu_custom_call.1} parent=23 // pred_check_branch
          %136 = sbr.rel (%p134) target = $region28
        $region27: #{tpu_custom_call.1} parent=23 // pred_region
          %s137 = sand.u32 %s25, 1
          %s138 = scalar_lea.sflag [#allocation3], %s137
          %s139 = sand.u32 %s25, 1
          %s140 = smul.addr %s139, 32
          %s141 = scalar_lea.vmem [#allocation2], %s140
          %s143 = ssub.s32 512, 512
          %144 = vsyncadd %s138, %s143
          %s145 = smul.addr %s15, 4
          %s146 = smul.addr %s145, 128
          %s147 = scalar_lea.hbm %s0, %s146
          %s148 = sshll.u32 %s141, 4
          %s149 = int_to_ptr.vmem [resolvable:$true] %s148
          %154 = dma.hbm_to_vmem [thread:$0]  %s147, 512, %s149, %s138, 256, 256, 16
        $region28: #{tpu_custom_call.1} parent=23 // pred_fallthru
          _
      $region24: #{tpu_custom_call.1} parent=5 // pred_fallthru
        _
      %p155 = scmp.le.s32.totalorder 1, %s15
      %p156 = scmp.lt.s32.totalorder %s15, 3
      %p157 = pnand %p155, %p156
      %p158 = pneg %p157
      // Predicated region
      $region29: #{tpu_custom_call.1} parent=5 // pred_check
        _
      $region30: #{tpu_custom_call.1} parent=5 // pred_check_branch
        %160 = sbr.rel (%p157) target = $region32
      $region31: #{tpu_custom_call.1} parent=5 // pred_region
        %s161 = ssub.s32 %s15, 1
        %s162 = sand.u32 %s28, 1
        %s163 = scalar_lea.sflag [#allocation3], %s162
        %s164 = sand.u32 %s28, 1
        %s165 = smul.addr %s164, 32
        %s166 = scalar_lea.vmem [#allocation2], %s165
        // Predicated region
        $region33: #{tpu_custom_call.1} parent=31 // pred_check
          %p167 = pneg %p41
        $region34: #{tpu_custom_call.1} parent=31 // pred_check_branch
          %169 = sbr.rel (%p167) target = $region36
        $region35: #{tpu_custom_call.1} parent=31 // pred_region
          %170 = dma.done %s163, 512
        $region36: #{tpu_custom_call.1} parent=31 // pred_fallthru
          _
        %s171 = sand.u32 %s28, 1
        %s172 = scalar_lea.sflag [#allocation3], %s171
        %s173 = sand.u32 %s28, 1
        %s174 = smul.addr %s173, 32
        %s175 = scalar_lea.vmem [#allocation2], %s174
        %p176 = pneg %p41
        %p177 = pneg %p38
        %p178 = pneg %p62
        %p179 = pneg %p59
        %p180 = pneg %p83
        %p181 = pneg %p80
        %p182 = pneg %p109
        %p183 = pneg %p106
        %s184 = sand.u32 %s96, 1
        %s185 = scalar_lea.sflag [#allocation4], %s184
        %s186 = sand.u32 %s96, 1
        %s187 = smul.addr %s186, 32
        %s188 = scalar_lea.vmem [#allocation5], %s187
        %v189 = vld [vmem:[%s166] sm:$0xff]
        %v190 = vld [vmem:[%s166 + $0x8] sm:$0xff]
        %v191 = vld [vmem:[%s166 + $0x10] sm:$0xff]
        %v192 = vld [vmem:[%s166 + $0x18] sm:$0xff]
        %v193 = vadd.f32 %v189, %v190
        %194 = vadd.xlane.f32.xlu0 %v193
        %v195 = vpop.xlane.xlu0 %194
        %v196 = vadd.f32 %v191, %v192
        %197 = vadd.xlane.f32.xlu0 %v196
        %v198 = vpop.xlane.xlu0 %197
        %v199 = vmul.f32 %v195, 0.00390625
        %v200 = vmul.f32 %v198, 0.00390625
        %v201 = vld [vmem:[%s1] sm:$0xff]
        %v202 = vld [vmem:[%s1 + $0x8] sm:$0xff]
        %v203 = vld [vmem:[%s2] sm:$0xff]
        %v204 = vld [vmem:[%s2 + $0x8] sm:$0xff]
        %vm205 = vcmask 130048
        %v207 = vsel %vm205, %v201, 0
        %v210 = vsel %vm205, %v202, 0
        %212 = vmatprep.subr.mxu0 0.0
        %213 = vmatpush1.msra.mxu0 0.0
        %214 = vmatprep.subr.mxu0 0.0
        %215 = vmatpush1.msra.mxu0 0.0
        %216 = vmatprep.subr.mxu0 0.0
        %217 = vmatpush1.msra.mxu0 0.0
        %218 = vmatprep.subr.mxu0 0.0
        %219 = vmatpush1.msra.mxu0 0.0
        %220 = vmatprep.subr.mxu0 0.0
        %221 = vmatpush1.msra.mxu0 0.0
        %222 = vmatprep.subr.mxu0 0.0
        %223 = vmatpush1.msra.mxu0 0.0
        %224 = vmatprep.subr.mxu0 0.0
        %225 = vmatpush1.msra.mxu0 0.0
        %226 = vmatprep.subr.mxu0 0.0
        %227 = vmatpush1.msra.mxu0 0.0
        %228 = vmatprep.subr.mxu0 0.0
        %229 = vmatpush1.msra.mxu0 0.0
        %230 = vmatprep.subr.mxu0 0.0
        %231 = vmatpush1.msra.mxu0 0.0
        %232 = vmatprep.subr.mxu0 0.0
        %233 = vmatpush1.msra.mxu0 0.0
        %234 = vmatprep.subr.mxu0 0.0
        %235 = vmatpush1.msra.mxu0 0.0
        %236 = vmatprep.subr.mxu0 0.0
        %237 = vmatpush1.msra.mxu0 0.0
        %238 = vmatprep.subr.mxu0 0.0
        %239 = vmatpush1.msra.mxu0 0.0
        %240 = vmatprep.subr.mxu0 0.0
        %241 = vmatpush1.msra.mxu0 %v200
        %242 = vmatprep.subr.mxu0 0.0
        %243 = vmatpush1.msra.mxu0 %v199
        %244 = vmatprep.subr.mxu0 0.0
        %245 = vmatpush2.msra.mxu0 0.0
        %246 = vmatprep.subr.mxu0 0.0
        %247 = vmatpush2.msra.mxu0 0.0
        %248 = vmatprep.subr.mxu0 0.0
        %249 = vmatpush2.msra.mxu0 0.0
        %250 = vmatprep.subr.mxu0 0.0
        %251 = vmatpush2.msra.mxu0 0.0
        %252 = vmatprep.subr.mxu0 0.0
        %253 = vmatpush2.msra.mxu0 0.0
        %254 = vmatprep.subr.mxu0 0.0
        %255 = vmatpush2.msra.mxu0 0.0
        %256 = vmatprep.subr.mxu0 0.0
        %257 = vmatpush2.msra.mxu0 0.0
        %258 = vmatprep.subr.mxu0 0.0
        %259 = vmatpush2.msra.mxu0 0.0
        %260 = vmatprep.subr.mxu0 0.0
        %261 = vmatpush2.msra.mxu0 0.0
        %262 = vmatprep.subr.mxu0 0.0
        %263 = vmatpush2.msra.mxu0 0.0
        %264 = vmatprep.subr.mxu0 0.0
        %265 = vmatpush2.msra.mxu0 0.0
        %266 = vmatprep.subr.mxu0 0.0
        %267 = vmatpush2.msra.mxu0 0.0
        %268 = vmatprep.subr.mxu0 0.0
        %269 = vmatpush2.msra.mxu0 0.0
        %270 = vmatprep.subr.mxu0 0.0
        %271 = vmatpush2.msra.mxu0 0.0
        %272 = vmatprep.subr.mxu0 0.0
        %273 = vmatpush2.msra.mxu0 0.0
        %274 = vmatprep.subr.mxu0 0.0
        %275 = vmatpush2.msra.mxu0 0.0
        %276 = vmatprep.mubr.f32.mxu0 0.0
        %277 = vmatmul.mubr.f32.gmra.mxu0 %v207
        %v278 = vpop.f32.mrf.mxu0
        %v279 = vadd.f32 %v203, %v278
        %v280 = vpop.f32.mrf.mxu0
        %281 = vmatprep.mubr.f32.mxu0 0.0
        %282 = vmatmul.mubr.f32.gmra.mxu0 %v210
        %v283 = vpop.f32.mrf.mxu0
        %v284 = vadd.f32 %v204, %v283
        %v285 = vpop.f32.mrf.mxu0
        %286 = vdwg.mxu0
        %v287 = vxor.u32 %v279, 2147483648
        %v288 = vxor.u32 %v284, 2147483648
        %v289 = vmul.f32 %v287, 1.442695
        %v290 = vpow.pop %v289
        %v291 = vmul.f32 %v288, 1.442695
        %v292 = vpow.pop %v291
        %v293 = vadd.f32 %v290, 1.0
        %v294 = vadd.f32 %v292, 1.0
        %v295 = vrcp.pop %v293
        %v296 = vmul.f32 1.0, %v295
        %v297 = vrcp.pop %v294
        %v298 = vmul.f32 1.0, %v297
        %300 = vset.pattern.permute.xlu0 0
        %301 = vperm.xlu0 %300, %v296
        %v302 = vpop.permute.xlu0 %301
        %305 = vset.pattern.permute.xlu0 0
        %306 = vperm.xlu0 %305, %v298
        %v307 = vpop.permute.xlu0 %306
        %v309 = vmul.f32 %v189, %v302
        %v310 = vmul.f32 %v190, %v302
        %v311 = vmul.f32 %v191, %v307
        %v312 = vmul.f32 %v192, %v307
        %313 = vst [vmem:[%s188] sm:$0xff] %v309
        %314 = vst [vmem:[%s188 + $0x8] sm:$0xff] %v310
        %315 = vst [vmem:[%s188 + $0x10] sm:$0xff] %v311
        %316 = vst [vmem:[%s188 + $0x18] sm:$0xff] %v312
        %s317 = sand.u32 %s96, 1
        %s318 = scalar_lea.sflag [#allocation4], %s317
        %s319 = sand.u32 %s96, 1
        %s320 = smul.addr %s319, 32
        %s321 = scalar_lea.vmem [#allocation5], %s320
        // Predicated region
        $region37: #{tpu_custom_call.1} parent=31 // pred_check
          %p322 = pneg %p106
        $region38: #{tpu_custom_call.1} parent=31 // pred_check_branch
          %324 = sbr.rel (%p322) target = $region40
        $region39: #{tpu_custom_call.1} parent=31 // pred_region
          %s326 = ssub.s32 512, 512
          %327 = vsyncadd %s318, %s326
          %s328 = smul.addr %s20, 4
          %s329 = smul.addr %s328, 128
          %s330 = scalar_lea.hbm %s3, %s329
          %s331 = sshll.u32 %s321, 4
          %s332 = int_to_ptr.vmem [resolvable:$true] %s331
          %337 = dma.vmem_to_hbm [thread:$0]  %s332, 512, %s330, %s318, 256, 256, 16
        $region40: #{tpu_custom_call.1} parent=31 // pred_fallthru
          _
      $region32: #{tpu_custom_call.1} parent=5 // pred_fallthru
        _
      %p338 = scmp.le.s32.totalorder 2, %s15
      // Predicated region
      $region41: #{tpu_custom_call.1} parent=5 // pred_check
        %p339 = pneg %p338
      $region42: #{tpu_custom_call.1} parent=5 // pred_check_branch
        %341 = sbr.rel (%p339) target = $region44
      $region43: #{tpu_custom_call.1} parent=5 // pred_region
        %s342 = ssub.s32 %s15, 2
        // Predicated region
        $region45: #{tpu_custom_call.1} parent=43 // pred_check
          %p343 = pneg %p112
        $region46: #{tpu_custom_call.1} parent=43 // pred_check_branch
          %345 = sbr.rel (%p343) target = $region48
        $region47: #{tpu_custom_call.1} parent=43 // pred_region
          %s346 = sand.u32 %s97, 1
          %s347 = scalar_lea.sflag [#allocation4], %s346
          %s348 = sand.u32 %s97, 1
          %s349 = smul.addr %s348, 32
          %s350 = scalar_lea.vmem [#allocation5], %s349
          %351 = dma.done %s347, 512
        $region48: #{tpu_custom_call.1} parent=43 // pred_fallthru
          _
      $region44: #{tpu_custom_call.1} parent=5 // pred_fallthru
        _
    $region6: #{tpu_custom_call.1} parent=1 // loop_footer
      %s19 = sadd.s32 1, %s15
    $region7: #{tpu_custom_call.1} parent=1 // loop_footer_branch
      %14 = sbr.rel target = $region3
    $region8: #{tpu_custom_call.1} parent=1 // loop_exit
      _
    %352 = vsyncpa [#allocation3], 1
    %s353 = scalar_lea.sflag [#allocation3], 1
    %354 = vsyncpa %s353, 1
    %355 = vsyncpa [#allocation4], 1
    %s356 = scalar_lea.sflag [#allocation4], 1
    %357 = vsyncpa %s356, 1

</llo_original>
